<compile_context>
chip_gen: v6e
topology: v6e:2x2x1
jax: 0.10.0
libtpu: 0.0.40
codegen_flags: <defaults>
</compile_context>

<pallas_src>
import functools

import jax
import jax.numpy as jnp
from jax import lax
from jax.experimental import pallas as pl
from jax.experimental.pallas import tpu as pltpu

LANE = 128
SUBLANE = 8


def _round_up(n, m):
    return ((n + m - 1) // m) * m


def _actor_critic_kernel(x_ref, w1_ref, b1_ref, wh_ref, bh_ref, out_ref, *,
                         action_dim):
    x = x_ref[...]                                             # [rows, S]

    # fc1 + ReLU (hidden dim zero-padded to a full 128-lane tile); bias/ReLU
    # in f32 regardless of matmul operand dtype.
    h = jnp.dot(x, w1_ref[...], preferred_element_type=jnp.float32)
    h = jnp.maximum(h + b1_ref[...], 0.0)                      # [rows, Hp] f32

    # Fused actor|critic head: single lane-dense MXU push -> [rows, 128]
    head = jnp.dot(h.astype(wh_ref.dtype), wh_ref[...],
                   preferred_element_type=jnp.float32)
    head = head + bh_ref[...]                                  # [rows, 128] f32

    # Masked softmax over the first `action_dim` lanes (actor logits);
    # lane `action_dim` carries the critic value and passes through raw,
    # remaining (zero-padded) lanes stay as-is (== 0).
    lane = lax.broadcasted_iota(jnp.int32, head.shape, 1)
    is_actor = lane < action_dim
    logits = jnp.where(is_actor, head, -jnp.inf)
    m = jnp.max(logits, axis=-1, keepdims=True)
    e = jnp.exp(logits - m)                # masked lanes: exp(-inf) == 0.0
    denom = jnp.sum(e, axis=-1, keepdims=True)
    probs = e / denom                      # exact normalization

    out_ref[...] = jnp.where(is_actor, probs, head)            # lane-dense vst


def actor_critic_forward(x, params, *, block_rows=256):
    """x: [B, state_dim] f32. Returns (probs [B, A], value [B, 1])."""
    A = params["action_dim"]
    w1p, b1p = params["w1p"], params["b1p"]
    whp, bhp = params["whp"], params["bhp"]
    B, S = x.shape
    Hp = w1p.shape[1]
    NP = whp.shape[1]                                          # padded head width

    # Batch tiling: multiple of 8 sublanes; pad rows so the grid divides evenly.
    block_rows = max(SUBLANE, _round_up(min(block_rows, _round_up(B, SUBLANE)),
                                        SUBLANE))
    Bp = _round_up(B, block_rows)
    xin = x.astype(w1p.dtype)              # bf16 operands if weights are bf16
    if Bp != B:
        xin = jnp.pad(xin, ((0, Bp - B), (0, 0)))
    n_blocks = Bp // block_rows

    # Weights: constant block index -> DMA'd once, VMEM-resident across grid.
    resident = lambda arr: pl.BlockSpec(arr.shape, lambda i: (0,) * arr.ndim)

    itemsize = xin.dtype.itemsize
    cost = pl.CostEstimate(
        flops=2 * Bp * S * Hp + 2 * Bp * Hp * NP,
        transcendentals=Bp * NP,
        bytes_accessed=(itemsize * (xin.size + w1p.size + whp.size)
                        + 4 * (b1p.size + bhp.size + Bp * NP)),
    )

    out = pl.pallas_call(
        functools.partial(_actor_critic_kernel, action_dim=A),
        out_shape=jax.ShapeDtypeStruct((Bp, NP), jnp.float32),
        grid=(n_blocks,),
        in_specs=[pl.BlockSpec((block_rows, S), lambda i: (i, 0)),
                  resident(w1p), resident(b1p),
                  resident(whp), resident(bhp)],
        out_specs=pl.BlockSpec((block_rows, NP), lambda i: (i, 0)),
        compiler_params=pltpu.CompilerParams(
            dimension_semantics=("parallel",)),
        cost_estimate=cost,
    )(xin, w1p, b1p, whp, bhp)

    # TODO(synk): inside a jitted rollout/training loop, consume the padded
    # [B, 128] slab directly (cols [0:A]=probs, col A=value) to avoid the two
    # slice kernels / extra HBM round trip below.
    probs = out[:B, :A]
    value = out[:B, A:A + 1]
    return probs, value


def init_params(key, state_dim, action_dim, hidden_dim=64,
                matmul_dtype=jnp.float32):
    """nn.Linear-style init (uniform +/- 1/sqrt(fan_in)), weights stored as
    [in_features, out_features]; also builds the zero-padded / fused tensors
    the kernel consumes. `matmul_dtype=jnp.bfloat16` enables the fast MXU /
    half-DMA path on v6e/v7x (biases stay f32)."""
    k1, k2, k3, k4, k5, k6 = jax.random.split(key, 6)

    def lin(kw, kb, fan_in, fan_out):
        bound = 1.0 / jnp.sqrt(jnp.float32(fan_in))
        w = jax.random.uniform(kw, (fan_in, fan_out), jnp.float32, -bound, bound)
        b = jax.random.uniform(kb, (1, fan_out), jnp.float32, -bound, bound)
        return w, b

    w1, b1 = lin(k1, k2, state_dim, hidden_dim)
    wa, ba = lin(k3, k4, hidden_dim, action_dim)
    wc, bc = lin(k5, k6, hidden_dim, 1)

    hp = _round_up(hidden_dim, LANE)           # 64 -> 128
    np_ = _round_up(action_dim + 1, LANE)      # A+1 -> 128
    assert action_dim + 1 <= np_

    # fc1, zero-padded on the hidden axis (padded bias cols = 0 => relu(0)=0).
    w1p = jnp.zeros((state_dim, hp), jnp.float32).at[:, :hidden_dim].set(w1)
    b1p = jnp.zeros((1, hp), jnp.float32).at[:, :hidden_dim].set(b1)

    # Fused actor|critic head, zero-padded to one 128-lane tile.
    w_head = jnp.concatenate([wa, wc], axis=1)                 # [H, A+1]
    b_head = jnp.concatenate([ba, bc], axis=1)                 # [1, A+1]
    whp = jnp.zeros((hp, np_), jnp.float32)
    whp = whp.at[:hidden_dim, :action_dim + 1].set(w_head)
    bhp = jnp.zeros((1, np_), jnp.float32).at[:, :action_dim + 1].set(b_head)

    return {
        # unpadded params (for the pure-JAX reference)
        "w1": w1, "b1": b1, "wa": wa, "ba": ba, "wc": wc, "bc": bc,
        # padded / fused params (kernel inputs); matmul operands in matmul_dtype
        "w1p": w1p.astype(matmul_dtype), "b1p": b1p,
        "whp": whp.astype(matmul_dtype), "bhp": bhp,
        "action_dim": action_dim,
    }


if __name__ == "__main__":
    # 16 rows, 8-row blocks -> 2 grid steps (exercises the streaming pipeline
    # and gives both v7x TensorCores a block).
    B, STATE_DIM, ACTION_DIM, HIDDEN = 16, 16, 4, 64

    key = jax.random.PRNGKey(0)
    kx, kp = jax.random.split(key)
    x = jax.random.normal(kx, (B, STATE_DIM), jnp.float32)
    params = init_params(kp, STATE_DIM, ACTION_DIM, HIDDEN)

    probs, value = actor_critic_forward(x, params, block_rows=8)
    probs = jax.block_until_ready(probs)
    value = jax.block_until_ready(value)

    # sanity: shapes match the PyTorch module, softmax rows sum to 1 (exact div)
    assert probs.shape == (B, ACTION_DIM)
    assert value.shape == (B, 1)
    assert jnp.allclose(jnp.sum(probs, axis=-1), 1.0, atol=1e-5)

    # cross-check against a pure-JAX reference on the unpadded params
    h_ref = jnp.maximum(x @ params["w1"] + params["b1"], 0.0)
    probs_ref = jax.nn.softmax(h_ref @ params["wa"] + params["ba"], axis=-1)
    value_ref = h_ref @ params["wc"] + params["bc"]
    assert jnp.allclose(probs, probs_ref, atol=1e-4)
    assert jnp.allclose(value, value_ref, atol=1e-4)

    print("KERNEL_OK")
</pallas_src>

<mosaic_0001>
module attributes {stable_mosaic.version = 11 : i64} {
  func.func @_actor_critic_kernel(%arg0: i32, %arg1: memref<8x16xf32, #tpu.memory_space<vmem>>, %arg2: memref<16x128xf32, #tpu.memory_space<vmem>>, %arg3: memref<1x128xf32, #tpu.memory_space<vmem>>, %arg4: memref<128x128xf32, #tpu.memory_space<vmem>>, %arg5: memref<1x128xf32, #tpu.memory_space<vmem>>, %arg6: memref<8x128xf32, #tpu.memory_space<vmem>>) attributes {dimension_semantics = [#tpu.dimension_semantics<parallel>], iteration_bounds = array<i64: 2>, scalar_prefetch = 0 : i64, scratch_operands = 0 : i64, tpu.core_type = #tpu.core_type<tc>, window_params = [{transform_indices = @transform_0, window_bounds = array<i64: 8, 16>}, {pipeline_mode = #tpu.pipeline_mode<synchronous>, transform_indices = @transform_1, window_bounds = array<i64: 16, 128>}, {pipeline_mode = #tpu.pipeline_mode<synchronous>, transform_indices = @transform_2, window_bounds = array<i64: 1, 128>}, {pipeline_mode = #tpu.pipeline_mode<synchronous>, transform_indices = @transform_3, window_bounds = array<i64: 128, 128>}, {pipeline_mode = #tpu.pipeline_mode<synchronous>, transform_indices = @transform_4, window_bounds = array<i64: 1, 128>}, {transform_indices = @transform_5, window_bounds = array<i64: 8, 128>}]} {
    %c0 = arith.constant 0 : index
    %c0_0 = arith.constant 0 : index
    %0 = vector.load %arg1[%c0, %c0_0] : memref<8x16xf32, #tpu.memory_space<vmem>>, vector<8x16xf32>
    %c0_1 = arith.constant 0 : index
    %c0_2 = arith.constant 0 : index
    %1 = vector.load %arg2[%c0_1, %c0_2] : memref<16x128xf32, #tpu.memory_space<vmem>>, vector<16x128xf32>
    %cst = arith.constant dense<0.000000e+00> : vector<8x128xf32>
    %2 = tpu.matmul %0, %1, %cst {dimension_numbers = #tpu.dot_dimension_numbers<[1], [0], [0], [1], [0, 0, 1, 1], [], []>} : vector<8x16xf32>, vector<16x128xf32>, vector<8x128xf32> -> vector<8x128xf32>
    %c0_3 = arith.constant 0 : index
    %c0_4 = arith.constant 0 : index
    %3 = vector.load %arg3[%c0_3, %c0_4] : memref<1x128xf32, #tpu.memory_space<vmem>>, vector<1x128xf32>
    %4 = vector.broadcast %3 : vector<1x128xf32> to vector<8x128xf32>
    %5 = arith.addf %2, %4 : vector<8x128xf32>
    %cst_5 = arith.constant 0.000000e+00 : f32
    %6 = vector.broadcast %cst_5 : f32 to vector<8x128xf32>
    %7 = arith.maximumf %5, %6 : vector<8x128xf32>
    %c0_6 = arith.constant 0 : index
    %c0_7 = arith.constant 0 : index
    %8 = vector.load %arg4[%c0_6, %c0_7] : memref<128x128xf32, #tpu.memory_space<vmem>>, vector<128x128xf32>
    %cst_8 = arith.constant dense<0.000000e+00> : vector<8x128xf32>
    %9 = tpu.matmul %7, %8, %cst_8 {dimension_numbers = #tpu.dot_dimension_numbers<[1], [0], [0], [1], [0, 0, 1, 1], [], []>} : vector<8x128xf32>, vector<128x128xf32>, vector<8x128xf32> -> vector<8x128xf32>
    %c0_9 = arith.constant 0 : index
    %c0_10 = arith.constant 0 : index
    %10 = vector.load %arg5[%c0_9, %c0_10] : memref<1x128xf32, #tpu.memory_space<vmem>>, vector<1x128xf32>
    %11 = vector.broadcast %10 : vector<1x128xf32> to vector<8x128xf32>
    %12 = arith.addf %9, %11 : vector<8x128xf32>
    %13 = tpu.iota {dimensions = array<i32: 1>} : vector<8x128xi32>
    %c4_i32 = arith.constant 4 : i32
    %14 = vector.broadcast %c4_i32 : i32 to vector<8x128xi32>
    %15 = arith.cmpi slt, %13, %14 : vector<8x128xi32>
    %cst_11 = arith.constant 0xFF800000 : f32
    %16 = vector.broadcast %cst_11 : f32 to vector<8x128xf32>
    %17 = arith.select %15, %12, %16 : vector<8x128xi1>, vector<8x128xf32>
    %cst_12 = arith.constant dense<0xFF800000> : vector<8xf32>
    %18 = vector.multi_reduction <maximumf>, %17, %cst_12 [1] : vector<8x128xf32> to vector<8xf32>
    %19 = vector.shape_cast %18 : vector<8xf32> to vector<8x1xf32>
    %20 = vector.broadcast %19 : vector<8x1xf32> to vector<8x128xf32>
    %21 = arith.subf %17, %20 : vector<8x128xf32>
    %22 = math.exp %21 : vector<8x128xf32>
    %cst_13 = arith.constant dense<0.000000e+00> : vector<8xf32>
    %23 = vector.multi_reduction <add>, %22, %cst_13 [1] : vector<8x128xf32> to vector<8xf32>
    %24 = vector.shape_cast %23 : vector<8xf32> to vector<8x1xf32>
    %25 = vector.broadcast %24 : vector<8x1xf32> to vector<8x128xf32>
    %26 = arith.divf %22, %25 : vector<8x128xf32>
    %27 = arith.select %15, %26, %12 : vector<8x128xi1>, vector<8x128xf32>
    %c0_14 = arith.constant 0 : index
    %c0_15 = arith.constant 0 : index
    %28 = vector.load %arg6[%c0_14, %c0_15] : memref<8x128xf32, #tpu.memory_space<vmem>>, vector<8x128xf32>
    tpu.vector_store %arg6[%c0_14, %c0_15], %27 {strides = array<i32>} : memref<8x128xf32, #tpu.memory_space<vmem>>, vector<8x128xf32>,
    return
  }
  func.func @transform_0(%arg0: i32) -> (i32, i32) {
    %c0_i32 = arith.constant 0 : i32
    %c0_i32_0 = arith.constant 0 : i32
    return %arg0, %c0_i32 : i32, i32
  }
  func.func @transform_1(%arg0: i32) -> (i32, i32) {
    %c0_i32 = arith.constant 0 : i32
    %c0_i32_0 = arith.constant 0 : i32
    %c0_i32_1 = arith.constant 0 : i32
    return %c0_i32, %c0_i32_0 : i32, i32
  }
  func.func @transform_2(%arg0: i32) -> (i32, i32) {
    %c0_i32 = arith.constant 0 : i32
    %c0_i32_0 = arith.constant 0 : i32
    %c0_i32_1 = arith.constant 0 : i32
    return %c0_i32, %c0_i32_0 : i32, i32
  }
  func.func @transform_3(%arg0: i32) -> (i32, i32) {
    %c0_i32 = arith.constant 0 : i32
    %c0_i32_0 = arith.constant 0 : i32
    %c0_i32_1 = arith.constant 0 : i32
    return %c0_i32, %c0_i32_0 : i32, i32
  }
  func.func @transform_4(%arg0: i32) -> (i32, i32) {
    %c0_i32 = arith.constant 0 : i32
    %c0_i32_0 = arith.constant 0 : i32
    %c0_i32_1 = arith.constant 0 : i32
    return %c0_i32, %c0_i32_0 : i32, i32
  }
  func.func @transform_5(%arg0: i32) -> (i32, i32) {
    %c0_i32 = arith.constant 0 : i32
    %c0_i32_0 = arith.constant 0 : i32
    return %arg0, %c0_i32 : i32, i32
  }
}

</mosaic_0001>

<llo_original>
// kernel: tpu_custom_call.1
$region0: #{tpu_custom_call.1}
  #allocation0 [shape = 'u32[]', space=smem, size = 0x4, offset = 0x4, fixed_abs, tag = 'smem constant byte address 0x4 - core index']
  #allocation1 [shape = 'u32[144,128]{1,0:T(1,128)}', space=vmem, size = 0x12000, scoped, tag = 'internal scratch']
  %s0 = inlined_call_operand.hbm [shape: f32[16,16], index: 0, kind: input, shape index: {}]
  %s1 = inlined_call_operand.hbm [shape: f32[16,128], index: 1, kind: input, shape index: {}]
  %s2 = inlined_call_operand.vmem [shape: f32[1,128], index: 2, kind: input, shape index: {}]
  %s3 = inlined_call_operand.hbm [shape: f32[128,128], index: 3, kind: input, shape index: {}]
  %s4 = inlined_call_operand.vmem [shape: f32[1,128], index: 4, kind: input, shape index: {}]
  %s5 = inlined_call_operand.hbm [shape: f32[16,128], index: 5, kind: output, shape index: {}]
  %s6 = sld [smem:[#allocation0]]
  $region65: #{tpu_custom_call.1} parent=0
    _
  %s8 = ssub.s32 1, %s6
  %s9 = scalar_select 0, %s8, %s6
  $region1: #{tpu_custom_call.1} parent=0
    #allocation2 [shape = 'u8[8192]{0}', space=vmem, size = 0x2000, scoped, tag = 'input window, operand 0']
    #allocation3 [shape = 's32[2]{0}', space=sflag, size = 0x8, scoped, tag = 'scoped memory for tpu_custom_call.1']
    #allocation4 [shape = 's32[2]{0}', space=sflag, size = 0x8, scoped, tag = 'scoped memory for tpu_custom_call.1']
    #allocation5 [shape = 'u8[8192]{0}', space=vmem, size = 0x2000, scoped, tag = 'input window, operand 1, single buffered']
    #allocation6 [shape = 's32[1]{0}', space=sflag, size = 0x4, scoped, tag = 'scoped memory for tpu_custom_call.1']
    #allocation7 [shape = 'u8[65536]{0}', space=vmem, size = 0x10000, scoped, tag = 'input window, operand 3, single buffered']
    #allocation8 [shape = 'u8[8192]{0}', space=vmem, size = 0x2000, scoped, tag = 'output window, operand 0']
    %10 = vsyncpa [#allocation3], 0
    %s11 = scalar_lea.sflag [#allocation3], 1
    %12 = vsyncpa %s11, 0
    %13 = vsyncpa [#allocation6], 0
    %14 = vsyncpa [#allocation4], 0
    %s15 = scalar_lea.sflag [#allocation4], 1
    %16 = vsyncpa %s15, 0
    loop: start=0, step=1, limit=4
    $region2: #{tpu_custom_call.1} parent=1 // loop_pre_header
      _
    $region3: #{tpu_custom_call.1} parent=1 // loop_header
      %s18 = sphi 0, %s22
      %p19 = scmp.ge.s32.totalorder %s18, 4
      %s28 = sphi 0, %s30
      %s31 = sphi 0, %s28
      %s32 = sphi 0, %s31
      %s48 = sphi 0, %s32
      %s52 = sphi 0, %s52
      %s54 = sphi 0, %s52
      %s55 = sphi 0, %s54
      %s69 = sphi 0, %s55
      %s73 = sphi 0, %s73
      %s75 = sphi 0, %s73
      %s76 = sphi 0, %s75
      %s90 = sphi 0, %s76
      %s94 = sphi 0, %s94
      %s96 = sphi 0, %s94
      %s97 = sphi 0, %s96
      %s111 = sphi 0, %s97
      %s115 = sphi 0, %s115
      %s117 = sphi 0, %s115
      %s118 = sphi 0, %s117
      %s132 = sphi 0, %s118
      %s138 = sphi 0, %s140
      %s141 = sphi 0, %s138
      %s142 = sphi 0, %s141
      %s158 = sphi 0, %s142
    $region4: #{tpu_custom_call.1} parent=1 // loop_header_branch
      %21 = sbr.rel (%p19) target = $region8
    $region5: #{tpu_custom_call.1} parent=1 // loop_body
      %s23 = ssub.s32 %s18, 1
      %s24 = ssub.s32 %s18, 2
      %s25 = sadd.s32 %s18, 1
      %s26 = ssub.s32 %s18, %s25
      %p27 = scmp.eq.s32.totalorder %s26, 0
      %s29 = sadd.s32 %s28, 1
      %s30 = scalar_select %p27, %s28, %s29
      %p33 = pneg %p27
      %p34 = scmp.eq.s32.totalorder %s18, 1
      %p35 = por %p33, %p34
      %p36 = scmp.ne.s32.totalorder %s28, %s31
      %p37 = scmp.eq.s32.totalorder %s18, 0
      %p38 = por %p36, %p37
      %p39 = scmp.ne.s32.totalorder %s28, %s31
      %p40 = scmp.eq.s32.totalorder %s23, 1
      %p41 = por %p39, %p40
      %p42 = scmp.ne.s32.totalorder %s31, %s32
      %p43 = scmp.eq.s32.totalorder %s23, 0
      %p44 = por %p42, %p43
      %p45 = scmp.ne.s32.totalorder %s31, %s32
      %p46 = scmp.eq.s32.totalorder %s24, 1
      %p47 = por %p45, %p46
      %p49 = scmp.ne.s32.totalorder %s32, %s48
      %p50 = scmp.eq.s32.totalorder %s24, 0
      %p51 = por %p49, %p50
      %s53 = sadd.s32 %s52, 1
      %p56 = scmp.eq.s32.totalorder %s18, 1
      %p57 = scmp.ne.s32.totalorder %s52, %s54
      %p58 = scmp.eq.s32.totalorder %s18, 0
      %p59 = por %p57, %p58
      %p60 = scmp.ne.s32.totalorder %s52, %s54
      %p61 = scmp.eq.s32.totalorder %s23, 1
      %p62 = por %p60, %p61
      %p63 = scmp.ne.s32.totalorder %s54, %s55
      %p64 = scmp.eq.s32.totalorder %s23, 0
      %p65 = por %p63, %p64
      %p66 = scmp.ne.s32.totalorder %s54, %s55
      %p67 = scmp.eq.s32.totalorder %s24, 1
      %p68 = por %p66, %p67
      %p70 = scmp.ne.s32.totalorder %s55, %s69
      %p71 = scmp.eq.s32.totalorder %s24, 0
      %p72 = por %p70, %p71
      %s74 = sadd.s32 %s73, 1
      %p77 = scmp.eq.s32.totalorder %s18, 1
      %p78 = scmp.ne.s32.totalorder %s73, %s75
      %p79 = scmp.eq.s32.totalorder %s18, 0
      %p80 = por %p78, %p79
      %p81 = scmp.ne.s32.totalorder %s73, %s75
      %p82 = scmp.eq.s32.totalorder %s23, 1
      %p83 = por %p81, %p82
      %p84 = scmp.ne.s32.totalorder %s75, %s76
      %p85 = scmp.eq.s32.totalorder %s23, 0
      %p86 = por %p84, %p85
      %p87 = scmp.ne.s32.totalorder %s75, %s76
      %p88 = scmp.eq.s32.totalorder %s24, 1
      %p89 = por %p87, %p88
      %p91 = scmp.ne.s32.totalorder %s76, %s90
      %p92 = scmp.eq.s32.totalorder %s24, 0
      %p93 = por %p91, %p92
      %s95 = sadd.s32 %s94, 1
      %p98 = scmp.eq.s32.totalorder %s18, 1
      %p99 = scmp.ne.s32.totalorder %s94, %s96
      %p100 = scmp.eq.s32.totalorder %s18, 0
      %p101 = por %p99, %p100
      %p102 = scmp.ne.s32.totalorder %s94, %s96
      %p103 = scmp.eq.s32.totalorder %s23, 1
      %p104 = por %p102, %p103
      %p105 = scmp.ne.s32.totalorder %s96, %s97
      %p106 = scmp.eq.s32.totalorder %s23, 0
      %p107 = por %p105, %p106
      %p108 = scmp.ne.s32.totalorder %s96, %s97
      %p109 = scmp.eq.s32.totalorder %s24, 1
      %p110 = por %p108, %p109
      %p112 = scmp.ne.s32.totalorder %s97, %s111
      %p113 = scmp.eq.s32.totalorder %s24, 0
      %p114 = por %p112, %p113
      %s116 = sadd.s32 %s115, 1
      %p119 = scmp.eq.s32.totalorder %s18, 1
      %p120 = scmp.ne.s32.totalorder %s115, %s117
      %p121 = scmp.eq.s32.totalorder %s18, 0
      %p122 = por %p120, %p121
      %p123 = scmp.ne.s32.totalorder %s115, %s117
      %p124 = scmp.eq.s32.totalorder %s23, 1
      %p125 = por %p123, %p124
      %p126 = scmp.ne.s32.totalorder %s117, %s118
      %p127 = scmp.eq.s32.totalorder %s23, 0
      %p128 = por %p126, %p127
      %p129 = scmp.ne.s32.totalorder %s117, %s118
      %p130 = scmp.eq.s32.totalorder %s24, 1
      %p131 = por %p129, %p130
      %p133 = scmp.ne.s32.totalorder %s118, %s132
      %p134 = scmp.eq.s32.totalorder %s24, 0
      %p135 = por %p133, %p134
      %s136 = ssub.s32 %s18, %s25
      %p137 = scmp.eq.s32.totalorder %s136, 0
      %s139 = sadd.s32 %s138, 1
      %s140 = scalar_select %p137, %s138, %s139
      %p143 = pneg %p137
      %p144 = scmp.eq.s32.totalorder %s18, 1
      %p145 = por %p143, %p144
      %p146 = scmp.ne.s32.totalorder %s138, %s141
      %p147 = scmp.eq.s32.totalorder %s18, 0
      %p148 = por %p146, %p147
      %p149 = scmp.ne.s32.totalorder %s138, %s141
      %p150 = scmp.eq.s32.totalorder %s23, 1
      %p151 = por %p149, %p150
      %p152 = scmp.ne.s32.totalorder %s141, %s142
      %p153 = scmp.eq.s32.totalorder %s23, 0
      %p154 = por %p152, %p153
      %p155 = scmp.ne.s32.totalorder %s141, %s142
      %p156 = scmp.eq.s32.totalorder %s24, 1
      %p157 = por %p155, %p156
      %p159 = scmp.ne.s32.totalorder %s142, %s158
      %p160 = scmp.eq.s32.totalorder %s24, 0
      %p161 = por %p159, %p160
      %p162 = scmp.le.s32.totalorder 1, %s18
      %p163 = scmp.lt.s32.totalorder %s18, 3
      %p164 = pnand %p162, %p163
      %p165 = pneg %p164
      // Predicated region
      $region9: #{tpu_custom_call.1} parent=5 // pred_check
        _
      $region10: #{tpu_custom_call.1} parent=5 // pred_check_branch
        %167 = sbr.rel (%p164) target = $region12
      $region11: #{tpu_custom_call.1} parent=5 // pred_region
        %s168 = ssub.s32 %s18, 1
        // Predicated region
        $region13: #{tpu_custom_call.1} parent=11 // pred_check
          %p169 = pneg %p65
        $region14: #{tpu_custom_call.1} parent=11 // pred_check_branch
          %171 = sbr.rel (%p169) target = $region16
        $region15: #{tpu_custom_call.1} parent=11 // pred_region
          %s173 = ssub.s32 256, 256
          %174 = vsyncadd [#allocation6], %s173
          %s175 = sshll.u32 [#allocation5], 4
          %s176 = int_to_ptr.vmem [resolvable:$true] %s175
          %181 = dma.hbm_to_vmem [thread:$0]  %s1, 256, %s176, [#allocation6], 128, 128, 8
        $region16: #{tpu_custom_call.1} parent=11 // pred_fallthru
          _
        // Predicated region
        $region17: #{tpu_custom_call.1} parent=11 // pred_check
          %p182 = pneg %p86
        $region18: #{tpu_custom_call.1} parent=11 // pred_check_branch
          %184 = sbr.rel (%p182) target = $region20
        $region19: #{tpu_custom_call.1} parent=11 // pred_region
          _
        $region20: #{tpu_custom_call.1} parent=11 // pred_fallthru
          _
        // Predicated region
        $region21: #{tpu_custom_call.1} parent=11 // pred_check
          %p185 = pneg %p107
        $region22: #{tpu_custom_call.1} parent=11 // pred_check_branch
          %187 = sbr.rel (%p185) target = $region24
        $region23: #{tpu_custom_call.1} parent=11 // pred_region
          %s189 = ssub.s32 2048, 2048
          %190 = vsyncadd [#allocation6], %s189
          %s191 = sshll.u32 [#allocation7], 4
          %s192 = int_to_ptr.vmem [resolvable:$true] %s191
          %197 = dma.hbm_to_vmem [thread:$0]  %s3, 2048, %s192, [#allocation6], 128, 128, 8
        $region24: #{tpu_custom_call.1} parent=11 // pred_fallthru
          _
        // Predicated region
        $region25: #{tpu_custom_call.1} parent=11 // pred_check
          %p198 = pneg %p128
        $region26: #{tpu_custom_call.1} parent=11 // pred_check_branch
          %200 = sbr.rel (%p198) target = $region28
        $region27: #{tpu_custom_call.1} parent=11 // pred_region
          _
        $region28: #{tpu_custom_call.1} parent=11 // pred_fallthru
          _
      $region12: #{tpu_custom_call.1} parent=5 // pred_fallthru
        _
      %p201 = scmp.lt.s32.totalorder %s18, 2
      // Predicated region
      $region29: #{tpu_custom_call.1} parent=5 // pred_check
        %p202 = pneg %p201
      $region30: #{tpu_custom_call.1} parent=5 // pred_check_branch
        %204 = sbr.rel (%p202) target = $region32
      $region31: #{tpu_custom_call.1} parent=5 // pred_region
        // Predicated region
        $region33: #{tpu_custom_call.1} parent=31 // pred_check
          %p205 = pneg %p38
        $region34: #{tpu_custom_call.1} parent=31 // pred_check_branch
          %207 = sbr.rel (%p205) target = $region36
        $region35: #{tpu_custom_call.1} parent=31 // pred_region
          %s208 = sand.u32 %s28, 1
          %s209 = scalar_lea.sflag [#allocation3], %s208
          %s210 = sand.u32 %s28, 1
          %s211 = smul.addr %s210, 8
          %s212 = scalar_lea.vmem [#allocation2], %s211
          %s214 = ssub.s32 128, 128
          %215 = vsyncadd %s209, %s214
          %s216 = smul.addr %s18, 128
          %s217 = scalar_lea.hbm %s0, %s216
          %s219 = sshll.u32 %s212, 4
          %s220 = int_to_ptr.vmem [resolvable:$true] %s219
          %222 = dma.hbm_to_vmem [thread:$0]  %s217, 128, %s220, %s209
        $region36: #{tpu_custom_call.1} parent=31 // pred_fallthru
          _
      $region32: #{tpu_custom_call.1} parent=5 // pred_fallthru
        _
      %p223 = scmp.le.s32.totalorder 1, %s18
      %p224 = scmp.lt.s32.totalorder %s18, 3
      %p225 = pnand %p223, %p224
      %p226 = pneg %p225
      // Predicated region
      $region37: #{tpu_custom_call.1} parent=5 // pred_check
        _
      $region38: #{tpu_custom_call.1} parent=5 // pred_check_branch
        %228 = sbr.rel (%p225) target = $region40
      $region39: #{tpu_custom_call.1} parent=5 // pred_region
        %s229 = ssub.s32 %s18, 1
        %s230 = sand.u32 %s31, 1
        %s231 = scalar_lea.sflag [#allocation3], %s230
        %s232 = sand.u32 %s31, 1
        %s233 = smul.addr %s232, 8
        %s234 = scalar_lea.vmem [#allocation2], %s233
        // Predicated region
        $region41: #{tpu_custom_call.1} parent=39 // pred_check
          %p235 = pneg %p44
        $region42: #{tpu_custom_call.1} parent=39 // pred_check_branch
          %237 = sbr.rel (%p235) target = $region44
        $region43: #{tpu_custom_call.1} parent=39 // pred_region
          %238 = dma.done %s231, 128
        $region44: #{tpu_custom_call.1} parent=39 // pred_fallthru
          _
        // Predicated region
        $region45: #{tpu_custom_call.1} parent=39 // pred_check
          %p239 = pneg %p65
        $region46: #{tpu_custom_call.1} parent=39 // pred_check_branch
          %241 = sbr.rel (%p239) target = $region48
        $region47: #{tpu_custom_call.1} parent=39 // pred_region
          %242 = dma.done [#allocation6], 256
        $region48: #{tpu_custom_call.1} parent=39 // pred_fallthru
          _
        // Predicated region
        $region49: #{tpu_custom_call.1} parent=39 // pred_check
          %p243 = pneg %p107
        $region50: #{tpu_custom_call.1} parent=39 // pred_check_branch
          %245 = sbr.rel (%p243) target = $region52
        $region51: #{tpu_custom_call.1} parent=39 // pred_region
          %246 = dma.done [#allocation6], 2048
        $region52: #{tpu_custom_call.1} parent=39 // pred_fallthru
          _
        %s247 = sand.u32 %s31, 1
        %s248 = scalar_lea.sflag [#allocation3], %s247
        %s249 = sand.u32 %s31, 1
        %s250 = smul.addr %s249, 8
        %s251 = scalar_lea.vmem [#allocation2], %s250
        %p252 = pneg %p44
        %p253 = pneg %p41
        %p254 = pneg %p65
        %p255 = pneg %p62
        %p256 = pneg %p86
        %p257 = pneg %p83
        %p258 = pneg %p107
        %p259 = pneg %p104
        %p260 = pneg %p128
        %p261 = pneg %p125
        %p262 = pneg %p154
        %p263 = pneg %p151
        %s264 = sand.u32 %s141, 1
        %s265 = scalar_lea.sflag [#allocation4], %s264
        %s266 = sand.u32 %s141, 1
        %s267 = smul.addr %s266, 8
        %s268 = scalar_lea.vmem [#allocation8], %s267
        %v269 = vld [vmem:[%s234] sm:$0xff]
        %v270 = vld [vmem:[#allocation5] sm:$0xff]
        %v271 = vld [vmem:[#allocation5 + $0x8] sm:$0xff]
        %v272 = vld [vmem:[%s2] sm:$0x1]
        %v274 = vlaneseq
        %v275 = vshrl.u32 %v274, 7
        %v276 = vsub.s32 0, %v275
        %v277 = vrot.slane %v272, %v276
        %vm279 = vcmask 130048
        %v281 = vsel %vm279, %v269, 0
        %283 = vmatprep.subr.mxu0 0.0
        %284 = vmatpush1.msra.mxu0 0.0
        %285 = vmatprep.subr.mxu0 0.0
        %286 = vmatpush1.msra.mxu0 0.0
        %287 = vmatprep.subr.mxu0 0.0
        %288 = vmatpush1.msra.mxu0 0.0
        %289 = vmatprep.subr.mxu0 0.0
        %290 = vmatpush1.msra.mxu0 0.0
        %291 = vmatprep.subr.mxu0 0.0
        %292 = vmatpush1.msra.mxu0 0.0
        %293 = vmatprep.subr.mxu0 0.0
        %294 = vmatpush1.msra.mxu0 0.0
        %295 = vmatprep.subr.mxu0 0.0
        %296 = vmatpush1.msra.mxu0 0.0
        %297 = vmatprep.subr.mxu0 0.0
        %298 = vmatpush1.msra.mxu0 0.0
        %299 = vmatprep.subr.mxu0 0.0
        %300 = vmatpush1.msra.mxu0 0.0
        %301 = vmatprep.subr.mxu0 0.0
        %302 = vmatpush1.msra.mxu0 0.0
        %303 = vmatprep.subr.mxu0 0.0
        %304 = vmatpush1.msra.mxu0 0.0
        %305 = vmatprep.subr.mxu0 0.0
        %306 = vmatpush1.msra.mxu0 0.0
        %307 = vmatprep.subr.mxu0 0.0
        %308 = vmatpush1.msra.mxu0 0.0
        %309 = vmatprep.subr.mxu0 0.0
        %310 = vmatpush1.msra.mxu0 0.0
        %311 = vmatprep.subr.mxu0 0.0
        %312 = vmatpush1.msra.mxu0 %v271
        %313 = vmatprep.subr.mxu0 0.0
        %314 = vmatpush1.msra.mxu0 %v270
        %315 = vmatprep.subr.mxu0 0.0
        %316 = vmatpush2.msra.mxu0 0.0
        %317 = vmatprep.subr.mxu0 0.0
        %318 = vmatpush2.msra.mxu0 0.0
        %319 = vmatprep.subr.mxu0 0.0
        %320 = vmatpush2.msra.mxu0 0.0
        %321 = vmatprep.subr.mxu0 0.0
        %322 = vmatpush2.msra.mxu0 0.0
        %323 = vmatprep.subr.mxu0 0.0
        %324 = vmatpush2.msra.mxu0 0.0
        %325 = vmatprep.subr.mxu0 0.0
        %326 = vmatpush2.msra.mxu0 0.0
        %327 = vmatprep.subr.mxu0 0.0
        %328 = vmatpush2.msra.mxu0 0.0
        %329 = vmatprep.subr.mxu0 0.0
        %330 = vmatpush2.msra.mxu0 0.0
        %331 = vmatprep.subr.mxu0 0.0
        %332 = vmatpush2.msra.mxu0 0.0
        %333 = vmatprep.subr.mxu0 0.0
        %334 = vmatpush2.msra.mxu0 0.0
        %335 = vmatprep.subr.mxu0 0.0
        %336 = vmatpush2.msra.mxu0 0.0
        %337 = vmatprep.subr.mxu0 0.0
        %338 = vmatpush2.msra.mxu0 0.0
        %339 = vmatprep.subr.mxu0 0.0
        %340 = vmatpush2.msra.mxu0 0.0
        %341 = vmatprep.subr.mxu0 0.0
        %342 = vmatpush2.msra.mxu0 0.0
        %343 = vmatprep.subr.mxu0 0.0
        %344 = vmatpush2.msra.mxu0 0.0
        %345 = vmatprep.subr.mxu0 0.0
        %346 = vmatpush2.msra.mxu0 0.0
        %347 = vmatprep.mubr.f32.mxu0 0.0
        %348 = vmatmul.mubr.f32.gmra.mxu0 %v281
        %v349 = vpop.f32.mrf.mxu0
        %v350 = vadd.f32 %v277, %v349
        %v351 = vpop.f32.mrf.mxu0
        %352 = vdwg.mxu0
        %v353 = vmax.f32 %v350, 0.0
        %v354 = vld [vmem:[#allocation7] sm:$0xff]
        %v355 = vld [vmem:[#allocation7 + $0x8] sm:$0xff]
        %v356 = vld [vmem:[#allocation7 + $0x10] sm:$0xff]
        %v357 = vld [vmem:[#allocation7 + $0x18] sm:$0xff]
        %v358 = vld [vmem:[#allocation7 + $0x20] sm:$0xff]
        %v359 = vld [vmem:[#allocation7 + $0x28] sm:$0xff]
        %v360 = vld [vmem:[#allocation7 + $0x30] sm:$0xff]
        %v361 = vld [vmem:[#allocation7 + $0x38] sm:$0xff]
        %v362 = vld [vmem:[#allocation7 + $0x40] sm:$0xff]
        %v363 = vld [vmem:[#allocation7 + $0x48] sm:$0xff]
        %v364 = vld [vmem:[#allocation7 + $0x50] sm:$0xff]
        %v365 = vld [vmem:[#allocation7 + $0x58] sm:$0xff]
        %v366 = vld [vmem:[#allocation7 + $0x60] sm:$0xff]
        %v367 = vld [vmem:[#allocation7 + $0x68] sm:$0xff]
        %v368 = vld [vmem:[#allocation7 + $0x70] sm:$0xff]
        %v369 = vld [vmem:[#allocation7 + $0x78] sm:$0xff]
        %v370 = vld [vmem:[%s4] sm:$0x1]
        %v372 = vlaneseq
        %v373 = vshrl.u32 %v372, 7
        %v374 = vsub.s32 0, %v373
        %v375 = vrot.slane %v370, %v374
        %377 = vmatprep.subr.mxu0 0.0
        %378 = vmatpush1.msra.mxu0 %v369
        %379 = vmatprep.subr.mxu0 0.0
        %380 = vmatpush1.msra.mxu0 %v368
        %381 = vmatprep.subr.mxu0 0.0
        %382 = vmatpush1.msra.mxu0 %v367
        %383 = vmatprep.subr.mxu0 0.0
        %384 = vmatpush1.msra.mxu0 %v366
        %385 = vmatprep.subr.mxu0 0.0
        %386 = vmatpush1.msra.mxu0 %v365
        %387 = vmatprep.subr.mxu0 0.0
        %388 = vmatpush1.msra.mxu0 %v364
        %389 = vmatprep.subr.mxu0 0.0
        %390 = vmatpush1.msra.mxu0 %v363
        %391 = vmatprep.subr.mxu0 0.0
        %392 = vmatpush1.msra.mxu0 %v362
        %393 = vmatprep.subr.mxu0 0.0
        %394 = vmatpush1.msra.mxu0 %v361
        %395 = vmatprep.subr.mxu0 0.0
        %396 = vmatpush1.msra.mxu0 %v360
        %397 = vmatprep.subr.mxu0 0.0
        %398 = vmatpush1.msra.mxu0 %v359
        %399 = vmatprep.subr.mxu0 0.0
        %400 = vmatpush1.msra.mxu0 %v358
        %401 = vmatprep.subr.mxu0 0.0
        %402 = vmatpush1.msra.mxu0 %v357
        %403 = vmatprep.subr.mxu0 0.0
        %404 = vmatpush1.msra.mxu0 %v356
        %405 = vmatprep.subr.mxu0 0.0
        %406 = vmatpush1.msra.mxu0 %v355
        %407 = vmatprep.subr.mxu0 0.0
        %408 = vmatpush1.msra.mxu0 %v354
        %409 = vmatprep.subr.mxu0 0.0
        %410 = vmatpush2.msra.mxu0 0.0
        %411 = vmatprep.subr.mxu0 0.0
        %412 = vmatpush2.msra.mxu0 0.0
        %413 = vmatprep.subr.mxu0 0.0
        %414 = vmatpush2.msra.mxu0 0.0
        %415 = vmatprep.subr.mxu0 0.0
        %416 = vmatpush2.msra.mxu0 0.0
        %417 = vmatprep.subr.mxu0 0.0
        %418 = vmatpush2.msra.mxu0 0.0
        %419 = vmatprep.subr.mxu0 0.0
        %420 = vmatpush2.msra.mxu0 0.0
        %421 = vmatprep.subr.mxu0 0.0
        %422 = vmatpush2.msra.mxu0 0.0
        %423 = vmatprep.subr.mxu0 0.0
        %424 = vmatpush2.msra.mxu0 0.0
        %425 = vmatprep.subr.mxu0 0.0
        %426 = vmatpush2.msra.mxu0 0.0
        %427 = vmatprep.subr.mxu0 0.0
        %428 = vmatpush2.msra.mxu0 0.0
        %429 = vmatprep.subr.mxu0 0.0
        %430 = vmatpush2.msra.mxu0 0.0
        %431 = vmatprep.subr.mxu0 0.0
        %432 = vmatpush2.msra.mxu0 0.0
        %433 = vmatprep.subr.mxu0 0.0
        %434 = vmatpush2.msra.mxu0 0.0
        %435 = vmatprep.subr.mxu0 0.0
        %436 = vmatpush2.msra.mxu0 0.0
        %437 = vmatprep.subr.mxu0 0.0
        %438 = vmatpush2.msra.mxu0 0.0
        %439 = vmatprep.subr.mxu0 0.0
        %440 = vmatpush2.msra.mxu0 0.0
        %441 = vmatprep.mubr.f32.mxu0 0.0
        %442 = vmatmul.mubr.f32.gmra.mxu0 %v353
        %v443 = vpop.f32.mrf.mxu0
        %v444 = vadd.f32 %v375, %v443
        %v445 = vpop.f32.mrf.mxu0
        %446 = vdwg.mxu0
        %v447 = vlaneseq
        %v448 = vand.u32 %v447, 127
        %vm449 = vcmp.lt.s32.totalorder %v448, 4
        %v450 = vsel %vm449, %v444, -inf
        %451 = vmax.xlane.f32.xlu0 %v450
        %v452 = vpop.xlane.xlu0 %451
        %v453 = vsub.f32 %v450, %v452
        %v454 = vmul.f32 %v453, 1.442695
        %v455 = vpow.pop %v454
        %456 = vadd.xlane.f32.xlu0 %v455
        %v457 = vpop.xlane.xlu0 %456
        %v458 = vrcp.pop %v457
        %v459 = vmul.f32 %v455, %v458
        %v460 = vsel %vm449, %v459, %v444
        %461 = vst [vmem:[%s268] sm:$0xff] %v460
        %s462 = sand.u32 %s141, 1
        %s463 = scalar_lea.sflag [#allocation4], %s462
        %s464 = sand.u32 %s141, 1
        %s465 = smul.addr %s464, 8
        %s466 = scalar_lea.vmem [#allocation8], %s465
        // Predicated region
        $region53: #{tpu_custom_call.1} parent=39 // pred_check
          %p467 = pneg %p151
        $region54: #{tpu_custom_call.1} parent=39 // pred_check_branch
          %469 = sbr.rel (%p467) target = $region56
        $region55: #{tpu_custom_call.1} parent=39 // pred_region
          %s471 = ssub.s32 128, 128
          %472 = vsyncadd %s463, %s471
          %s473 = smul.addr %s23, 128
          %s474 = scalar_lea.hbm %s5, %s473
          %s476 = sshll.u32 %s466, 4
          %s477 = int_to_ptr.vmem [resolvable:$true] %s476
          %479 = dma.vmem_to_hbm [thread:$0]  %s477, 128, %s474, %s463
        $region56: #{tpu_custom_call.1} parent=39 // pred_fallthru
          _
      $region40: #{tpu_custom_call.1} parent=5 // pred_fallthru
        _
      %p480 = scmp.le.s32.totalorder 2, %s18
      // Predicated region
      $region57: #{tpu_custom_call.1} parent=5 // pred_check
        %p481 = pneg %p480
      $region58: #{tpu_custom_call.1} parent=5 // pred_check_branch
        %483 = sbr.rel (%p481) target = $region60
      $region59: #{tpu_custom_call.1} parent=5 // pred_region
        %s484 = ssub.s32 %s18, 2
        // Predicated region
        $region61: #{tpu_custom_call.1} parent=59 // pred_check
          %p485 = pneg %p157
        $region62: #{tpu_custom_call.1} parent=59 // pred_check_branch
          %487 = sbr.rel (%p485) target = $region64
        $region63: #{tpu_custom_call.1} parent=59 // pred_region
          %s488 = sand.u32 %s142, 1
          %s489 = scalar_lea.sflag [#allocation4], %s488
          %s490 = sand.u32 %s142, 1
          %s491 = smul.addr %s490, 8
          %s492 = scalar_lea.vmem [#allocation8], %s491
          %493 = dma.done %s489, 128
        $region64: #{tpu_custom_call.1} parent=59 // pred_fallthru
          _
      $region60: #{tpu_custom_call.1} parent=5 // pred_fallthru
        _
    $region6: #{tpu_custom_call.1} parent=1 // loop_footer
      %s22 = sadd.s32 1, %s18
    $region7: #{tpu_custom_call.1} parent=1 // loop_footer_branch
      %17 = sbr.rel target = $region3
    $region8: #{tpu_custom_call.1} parent=1 // loop_exit
      _
    %494 = vsyncpa [#allocation3], 1
    %s495 = scalar_lea.sflag [#allocation3], 1
    %496 = vsyncpa %s495, 1
    %497 = vsyncpa [#allocation6], 1
    %498 = vsyncpa [#allocation4], 1
    %s499 = scalar_lea.sflag [#allocation4], 1
    %500 = vsyncpa %s499, 1

</llo_original>
